<compile_context>
chip_gen: v7x
topology: tpu7x:2x2x1
jax: 0.10.0
libtpu: 0.0.40
codegen_flags: <defaults>
</compile_context>

<pallas_src>
import functools

import jax
import jax.numpy as jnp
from jax import lax
from jax.experimental import pallas as pl
from jax.experimental.pallas import tpu as pltpu


# ----------------------------- sizing helpers ------------------------------

_LANE = 128
_MAX_RESIDENT_M = 1024   # resident (M_pad, M_pad) f32 gram accumulator <= 4 MiB


def _round_up(x, m):
    return (x + m - 1) // m * m


def _vmem_budget_and_limit():
    """Working-set target and scoped-VMEM limit, derived from the chip."""
    try:
        cap = int(pltpu.get_tpu_info().vmem_capacity_bytes)
    except Exception:  # interpreter / query unavailable -> assume v7x (64 MiB)
        cap = 64 << 20
    budget = min(int(cap * 0.55), 64 << 20)   # ~35 MiB on v7x, 64 MiB on v5e/v6e
    limit = min(int(cap * 0.75), 96 << 20)    # ~48 MiB on v7x, 96 MiB on v5e/v6e
    return budget, limit


def _split_k(k, tk_cap):
    """Split K into nk equal 128-aligned tiles, minimizing padding."""
    k128 = _round_up(max(k, 1), _LANE)
    tk_cap = max(_LANE, (tk_cap // _LANE) * _LANE)
    nk = -(-k128 // min(tk_cap, k128))
    tk = _round_up(-(-k128 // nk), _LANE)
    return nk * tk, tk                       # (k_pad, tk)


def _resident_plan(m, k, budget, max_resident_m, tk_cap_user=None):
    """Plan for the resident full-gram path; None if it does not fit."""
    m_pad = _round_up(max(m, 1), _LANE)
    if m_pad > max_resident_m:
        return None
    fixed = 3 * m_pad * m_pad * 4            # acc + double-buffered target
    if budget - fixed < 2 * m_pad * _LANE * 4:
        return None
    tk_cap = (budget - fixed) // (2 * m_pad * 4)
    if tk_cap_user is not None:
        tk_cap = min(tk_cap, max(_LANE, tk_cap_user))
    k_pad, tk = _split_k(k, tk_cap)
    return m_pad, k_pad, tk


def _tiled_plan(m, k, tm, tk):
    tm = tm or 256
    if tk is None:
        k_pad, tk = _split_k(k, 2048)
    else:
        k_pad = _round_up(k, tk)
    m_pad = _round_up(m, tm)
    return m_pad, k_pad, tm, tk


def _pad_feats(x, m, k, m_pad, k_pad):
    feats = x.reshape(m, k)
    if (m_pad, k_pad) != (m, k):
        feats = jnp.pad(feats, ((0, m_pad - m), (0, k_pad - k)))
    return feats


def _fit_target(tgt_padded, m_pad):
    """Adapt a stored padded target gram to the current M padding (zeros only)."""
    tgt = jnp.asarray(tgt_padded, jnp.float32)
    if tgt.shape[0] == m_pad:
        return tgt
    if tgt.shape[0] > m_pad:
        return tgt[:m_pad, :m_pad]
    p = m_pad - tgt.shape[0]
    return jnp.pad(tgt, ((0, p), (0, p)))


# ------------------------- resident-accumulator path ------------------------

def _gram_resident_kernel(feat_ref, g_ref, *, inv_scale):
    kk = pl.program_id(0)

    @pl.when(kk == 0)
    def _():
        g_ref[...] = jnp.zeros_like(g_ref)

    f = feat_ref[...]
    # F_slab @ F_slab^T: contract the last dim of both operands -> MXU matmul
    # with a transposed RHS, never materializing the transpose.
    g_ref[...] += lax.dot_general(
        f, f, dimension_numbers=(((1,), (1,)), ((), ())),
        preferred_element_type=jnp.float32)

    @pl.when(kk == pl.num_programs(0) - 1)
    def _():
        g_ref[...] = g_ref[...] * inv_scale


def _style_loss_resident_kernel(feat_ref, tgt_ref, loss_ref, acc_ref,
                                *, inv_scale, inv_nelem):
    kk = pl.program_id(0)

    @pl.when(kk == 0)
    def _():
        acc_ref[...] = jnp.zeros_like(acc_ref)

    f = feat_ref[...]
    acc_ref[...] += lax.dot_general(
        f, f, dimension_numbers=(((1,), (1,)), ((), ())),
        preferred_element_type=jnp.float32)

    @pl.when(kk == pl.num_programs(0) - 1)
    def _():
        # Fused MSE finalize: gram never round-trips to HBM.  Padded rows/cols
        # are zero in both the gram and the target, so they add nothing.
        d = acc_ref[...] * inv_scale - tgt_ref[...]
        loss_ref[...] = jnp.sum(d * d, axis=(0, 1), keepdims=True) * inv_nelem


# --------------------------- tiled triangular path ---------------------------

def _gram_tiled_kernel(feat_i_ref, feat_j_ref, g_ref, acc_ref, *, inv_scale):
    kk = pl.program_id(2)

    @pl.when(kk == 0)
    def _():
        acc_ref[...] = jnp.zeros_like(acc_ref)

    acc_ref[...] += lax.dot_general(
        feat_i_ref[...], feat_j_ref[...],
        dimension_numbers=(((1,), (1,)), ((), ())),
        preferred_element_type=jnp.float32)

    @pl.when(kk == pl.num_programs(2) - 1)
    def _():
        g_ref[...] = (acc_ref[...] * inv_scale).astype(g_ref.dtype)


def _style_loss_tiled_kernel(bi_ref, bj_ref, feat_i_ref, feat_j_ref, tgt_ref,
                             loss_ref, acc_ref, sse_ref, *, inv_scale, inv_nelem):
    t = pl.program_id(0)          # upper-triangular block index
    kk = pl.program_id(1)         # contraction step
    nt = pl.num_programs(0)
    nk = pl.num_programs(1)

    @pl.when(jnp.logical_and(t == 0, kk == 0))
    def _():
        sse_ref[...] = jnp.zeros_like(sse_ref)

    @pl.when(kk == 0)
    def _():
        acc_ref[...] = jnp.zeros_like(acc_ref)

    acc_ref[...] += lax.dot_general(
        feat_i_ref[...], feat_j_ref[...],
        dimension_numbers=(((1,), (1,)), ((), ())),
        preferred_element_type=jnp.float32)

    @pl.when(kk == nk - 1)
    def _():
        # Gram and target are both symmetric (target always comes from
        # gram_matrix_padded here), so off-diagonal blocks count twice.
        d = acc_ref[...] * inv_scale - tgt_ref[...]
        wgt = jnp.where(bi_ref[t] == bj_ref[t], 1.0, 2.0).astype(jnp.float32)
        sse_ref[...] += wgt * jnp.sum(d * d, axis=(0, 1), keepdims=True)

    @pl.when(jnp.logical_and(t == nt - 1, kk == nk - 1))
    def _():
        loss_ref[...] = sse_ref[...] * inv_nelem


# --------------------------------- wrappers ----------------------------------

def gram_matrix_padded(x, *, max_resident_m=_MAX_RESIDENT_M, tm=None, tk=None):
    """(B,H,W,C) -> (padded float32 gram of shape (m_pad, m_pad), true m)."""
    b, h, w, c = x.shape
    m, k = b * h, w * c
    inv_scale = 1.0 / float(b * h * w * c)
    budget, limit = _vmem_budget_and_limit()

    plan = None if tm is not None else _resident_plan(m, k, budget,
                                                      max_resident_m, tk)
    if plan is not None:
        m_pad, k_pad, tk_r = plan
        feats = _pad_feats(x, m, k, m_pad, k_pad)
        nk = k_pad // tk_r
        g_pad = pl.pallas_call(
            functools.partial(_gram_resident_kernel, inv_scale=inv_scale),
            out_shape=jax.ShapeDtypeStruct((m_pad, m_pad), jnp.float32),
            grid_spec=pltpu.PrefetchScalarGridSpec(
                num_scalar_prefetch=0,
                grid=(nk,),
                in_specs=[pl.BlockSpec((m_pad, tk_r), lambda kk: (0, kk))],
                out_specs=pl.BlockSpec((m_pad, m_pad), lambda kk: (0, 0))),
            compiler_params=pltpu.CompilerParams(
                dimension_semantics=("arbitrary",),
                vmem_limit_bytes=limit),
        )(feats)
        return g_pad, m

    # Tiled fallback for very large M.
    m_pad, k_pad, tm_t, tk_t = _tiled_plan(m, k, tm, tk)
    feats = _pad_feats(x, m, k, m_pad, k_pad)
    nm, nk = m_pad // tm_t, k_pad // tk_t
    g_pad = pl.pallas_call(
        functools.partial(_gram_tiled_kernel, inv_scale=inv_scale),
        out_shape=jax.ShapeDtypeStruct((m_pad, m_pad), jnp.float32),
        grid_spec=pltpu.PrefetchScalarGridSpec(
            num_scalar_prefetch=0,
            grid=(nm, nm, nk),
            in_specs=[pl.BlockSpec((tm_t, tk_t), lambda i, j, kk: (i, kk)),
                      pl.BlockSpec((tm_t, tk_t), lambda i, j, kk: (j, kk))],
            out_specs=pl.BlockSpec((tm_t, tm_t), lambda i, j, kk: (i, j)),
            scratch_shapes=[pltpu.VMEM((tm_t, tm_t), jnp.float32)]),
        compiler_params=pltpu.CompilerParams(
            dimension_semantics=("parallel", "parallel", "arbitrary"),
            vmem_limit_bytes=limit),
    )(feats, feats)
    return g_pad, m


def gram_matrix(x, **kw):
    """Unpadded gram, matching the PyTorch helper."""
    g_pad, m = gram_matrix_padded(x, **kw)
    return g_pad[:m, :m]


def style_loss(x, target_padded, *, max_resident_m=_MAX_RESIDENT_M,
               tm=None, tk=None):
    """Scalar MSE between gram(x) and the (padded) target gram, fully fused."""
    b, h, w, c = x.shape
    m, k = b * h, w * c
    inv_scale = 1.0 / float(b * h * w * c)
    inv_nelem = 1.0 / float(m * m)
    budget, limit = _vmem_budget_and_limit()

    plan = None if tm is not None else _resident_plan(m, k, budget,
                                                      max_resident_m, tk)
    if plan is not None:
        m_pad, k_pad, tk_r = plan
        feats = _pad_feats(x, m, k, m_pad, k_pad)
        tgt = _fit_target(target_padded, m_pad)
        nk = k_pad // tk_r
        loss = pl.pallas_call(
            functools.partial(_style_loss_resident_kernel,
                              inv_scale=inv_scale, inv_nelem=inv_nelem),
            out_shape=jax.ShapeDtypeStruct((1, 1), jnp.float32),
            grid_spec=pltpu.PrefetchScalarGridSpec(
                num_scalar_prefetch=0,
                grid=(nk,),
                in_specs=[
                    pl.BlockSpec((m_pad, tk_r), lambda kk: (0, kk)),
                    # constant index map -> target DMA'd once for the whole call
                    pl.BlockSpec((m_pad, m_pad), lambda kk: (0, 0)),
                ],
                out_specs=pl.BlockSpec((1, 1), lambda kk: (0, 0)),
                scratch_shapes=[pltpu.VMEM((m_pad, m_pad), jnp.float32)]),
            compiler_params=pltpu.CompilerParams(
                dimension_semantics=("arbitrary",),
                vmem_limit_bytes=limit),
        )(feats, tgt)
        return loss[0, 0]

    # Tiled triangular fallback (large M): upper-triangular block enumeration.
    m_pad, k_pad, tm_t, tk_t = _tiled_plan(m, k, tm, tk)
    feats = _pad_feats(x, m, k, m_pad, k_pad)
    tgt = _fit_target(target_padded, m_pad)
    nm, nk = m_pad // tm_t, k_pad // tk_t
    tri = [(i, j) for i in range(nm) for j in range(i, nm)]
    bi = jnp.asarray([p[0] for p in tri], jnp.int32)
    bj = jnp.asarray([p[1] for p in tri], jnp.int32)
    n_tri = len(tri)

    loss = pl.pallas_call(
        functools.partial(_style_loss_tiled_kernel,
                          inv_scale=inv_scale, inv_nelem=inv_nelem),
        out_shape=jax.ShapeDtypeStruct((1, 1), jnp.float32),
        grid_spec=pltpu.PrefetchScalarGridSpec(
            num_scalar_prefetch=2,
            grid=(n_tri, nk),
            in_specs=[
                pl.BlockSpec((tm_t, tk_t), lambda t, kk, bi_r, bj_r: (bi_r[t], kk)),
                pl.BlockSpec((tm_t, tk_t), lambda t, kk, bi_r, bj_r: (bj_r[t], kk)),
                # target block independent of kk -> fetched once per output block
                pl.BlockSpec((tm_t, tm_t),
                             lambda t, kk, bi_r, bj_r: (bi_r[t], bj_r[t])),
            ],
            out_specs=pl.BlockSpec((1, 1), lambda t, kk, bi_r, bj_r: (0, 0)),
            scratch_shapes=[pltpu.VMEM((tm_t, tm_t), jnp.float32),   # gram block
                            pltpu.VMEM((1, 1), jnp.float32)]),       # running SSE
        # TODO(synk): on v7x, shard the t axis across the two TensorCores by
        # emitting per-block partial SSEs and summing them outside the kernel.
        compiler_params=pltpu.CompilerParams(
            dimension_semantics=("arbitrary", "arbitrary"),
            vmem_limit_bytes=limit),
    )(bi, bj, feats, feats, tgt)
    return loss[0, 0]


# -------------------------------- module port --------------------------------

class StyleLoss:
    """JAX/Pallas port of the PyTorch StyleLoss module."""

    def __init__(self, target_feature, *, max_resident_m=_MAX_RESIDENT_M,
                 tm=None, tk=None):
        self._max_resident_m = max_resident_m
        self._tm, self._tk = tm, tk
        # Target gram computed once ("detach"); keep the padded version so the
        # forward pass never re-slices / re-pads it.
        g_pad, m = gram_matrix_padded(target_feature,
                                      max_resident_m=max_resident_m, tm=tm, tk=tk)
        self._target_padded, self._m = g_pad, m
        self.target = g_pad[:m, :m]
        # mse_loss(target, target) == 0, matching the PyTorch __init__.
        self.loss = jnp.float32(0.0)

    def __call__(self, x):
        # TODO(synk): mutating self.loss mirrors the PyTorch module but does not
        # compose with jax.jit/grad tracing; prefer returning (x, loss) there.
        self.loss = style_loss(x, self._target_padded,
                               max_resident_m=self._max_resident_m,
                               tm=self._tm, tk=self._tk)
        return x  # forward returns the input unchanged


# ----------------------------------- test -------------------------------------

if __name__ == "__main__":
    key = jax.random.PRNGKey(0)

    def gram_ref(a):
        b, h, w, c = a.shape
        f = a.reshape(b * h, w * c).astype(jnp.float32)
        return (f @ f.T) / (b * h * w * c)

    def check(module, x, tf):
        out = module(x)
        out, loss = jax.block_until_ready((out, module.loss))
        t_ref = gram_ref(tf)
        loss_ref = jnp.mean((gram_ref(x) - t_ref) ** 2)
        assert out.shape == x.shape and out.dtype == x.dtype
        assert jnp.allclose(out, x)
        assert jnp.allclose(module.target, t_ref, rtol=1e-4, atol=1e-6)
        assert jnp.allclose(loss, loss_ref, rtol=1e-4, atol=1e-8), (loss, loss_ref)

    # 1) small canonical shape -> resident fused path, single K step
    k1, k2, key = jax.random.split(key, 3)
    tf1 = jax.random.normal(k1, (2, 16, 16, 4), dtype=jnp.float32)
    x1 = jax.random.normal(k2, (2, 16, 16, 4), dtype=jnp.float32)
    check(StyleLoss(tf1), x1, tf1)

    # 2) resident fused path with a multi-step K loop (tk caps the K tile)
    k3, k4, key = jax.random.split(key, 3)
    tf2 = jax.random.normal(k3, (2, 16, 8, 40), dtype=jnp.float32)   # m=32, k=320
    x2 = jax.random.normal(k4, (2, 16, 8, 40), dtype=jnp.float32)
    check(StyleLoss(tf2, tk=128), x2, tf2)

    # 3) forced tiled triangular fallback: multi-block triangle, multi-K
    k5, k6 = jax.random.split(key)
    tf3 = jax.random.normal(k5, (2, 72, 8, 40), dtype=jnp.float32)   # m=144, k=320
    x3 = jax.random.normal(k6, (2, 72, 8, 40), dtype=jnp.float32)
    check(StyleLoss(tf3, tm=128, tk=128), x3, tf3)

    print("KERNEL_OK")
</pallas_src>

<mosaic_0001>
module attributes {stable_mosaic.version = 11 : i64} {
  func.func @_gram_resident_kernel(%arg0: i32, %arg1: memref<128x128xf32, #tpu.memory_space<vmem>>, %arg2: memref<128x128xf32, #tpu.memory_space<vmem>>) attributes {dimension_semantics = [#tpu.dimension_semantics<arbitrary>], iteration_bounds = array<i64: 1>, scalar_prefetch = 0 : i64, scratch_operands = 0 : i64, tpu.core_type = #tpu.core_type<tc>, window_params = [{transform_indices = @transform_0, window_bounds = array<i64: 128, 128>}, {pipeline_mode = #tpu.pipeline_mode<synchronous>, transform_indices = @transform_1, window_bounds = array<i64: 128, 128>}]} {
    %c0_i32 = arith.constant 0 : i32
    %0 = arith.cmpi eq, %arg0, %c0_i32 : i32
    %1 = arith.extui %0 : i1 to i32
    %c0_i32_0 = arith.constant 0 : i32
    %2 = arith.cmpi ne, %1, %c0_i32_0 : i32
    scf.if %2 {
      %cst_8 = arith.constant 0.000000e+00 : f32
      %11 = vector.broadcast %cst_8 : f32 to vector<128x128xf32>
      %c0_9 = arith.constant 0 : index
      %c0_10 = arith.constant 0 : index
      %12 = vector.load %arg2[%c0_9, %c0_10] : memref<128x128xf32, #tpu.memory_space<vmem>>, vector<128x128xf32>
      tpu.vector_store %arg2[%c0_9, %c0_10], %11 {strides = array<i32>} : memref<128x128xf32, #tpu.memory_space<vmem>>, vector<128x128xf32>,
    } else {
    }
    %c0 = arith.constant 0 : index
    %c0_1 = arith.constant 0 : index
    %3 = vector.load %arg1[%c0, %c0_1] : memref<128x128xf32, #tpu.memory_space<vmem>>, vector<128x128xf32>
    %c0_2 = arith.constant 0 : index
    %c0_3 = arith.constant 0 : index
    %4 = vector.load %arg2[%c0_2, %c0_3] : memref<128x128xf32, #tpu.memory_space<vmem>>, vector<128x128xf32>
    %cst = arith.constant dense<0.000000e+00> : vector<128x128xf32>
    %5 = tpu.matmul %3, %3, %cst {dimension_numbers = #tpu.dot_dimension_numbers<[1], [1], [0], [0], [0, 0, 1, 0], [], []>} : vector<128x128xf32>, vector<128x128xf32>, vector<128x128xf32> -> vector<128x128xf32>
    %6 = arith.addf %4, %5 : vector<128x128xf32>
    %c0_4 = arith.constant 0 : index
    %c0_5 = arith.constant 0 : index
    %7 = vector.load %arg2[%c0_4, %c0_5] : memref<128x128xf32, #tpu.memory_space<vmem>>, vector<128x128xf32>
    tpu.vector_store %arg2[%c0_4, %c0_5], %6 {strides = array<i32>} : memref<128x128xf32, #tpu.memory_space<vmem>>, vector<128x128xf32>,
    %c0_i32_6 = arith.constant 0 : i32
    %8 = arith.cmpi eq, %arg0, %c0_i32_6 : i32
    %9 = arith.extui %8 : i1 to i32
    %c0_i32_7 = arith.constant 0 : i32
    %10 = arith.cmpi ne, %9, %c0_i32_7 : i32
    scf.if %10 {
      %c0_8 = arith.constant 0 : index
      %c0_9 = arith.constant 0 : index
      %11 = vector.load %arg2[%c0_8, %c0_9] : memref<128x128xf32, #tpu.memory_space<vmem>>, vector<128x128xf32>
      %cst_10 = arith.constant 4.8828125E-4 : f32
      %12 = vector.broadcast %cst_10 : f32 to vector<128x128xf32>
      %13 = arith.mulf %11, %12 : vector<128x128xf32>
      %c0_11 = arith.constant 0 : index
      %c0_12 = arith.constant 0 : index
      %14 = vector.load %arg2[%c0_11, %c0_12] : memref<128x128xf32, #tpu.memory_space<vmem>>, vector<128x128xf32>
      tpu.vector_store %arg2[%c0_11, %c0_12], %13 {strides = array<i32>} : memref<128x128xf32, #tpu.memory_space<vmem>>, vector<128x128xf32>,
    } else {
    }
    return
  }
  func.func @transform_0(%arg0: i32) -> (i32, i32) {
    %c0_i32 = arith.constant 0 : i32
    %c0_i32_0 = arith.constant 0 : i32
    return %c0_i32, %arg0 : i32, i32
  }
  func.func @transform_1(%arg0: i32) -> (i32, i32) {
    %c0_i32 = arith.constant 0 : i32
    %c0_i32_0 = arith.constant 0 : i32
    %c0_i32_1 = arith.constant 0 : i32
    return %c0_i32, %c0_i32_0 : i32, i32
  }
}

</mosaic_0001>

<llo_original>
// kernel: tpu_custom_call.1
$region0: #{tpu_custom_call.1}
  #allocation0 [shape = 'u32[]', space=smem, size = 0x4, offset = 0x4, fixed_abs, tag = 'smem constant byte address 0x4 - core index']
  #allocation1 [shape = 'u32[144,128]{1,0:T(1,128)}', space=vmem, size = 0x12000, scoped, tag = 'internal scratch']
  %s0 = inlined_call_operand.hbm [shape: f32[128,128], index: 0, kind: input, shape index: {}]
  %s1 = inlined_call_operand.hbm [shape: f32[128,128], index: 1, kind: output, shape index: {}]
  %s2 = sld [smem:[#allocation0]]
  $region26: #{tpu_custom_call.1} parent=0
    _
  %s4 = ssub.s32 1, %s2
  %s5 = scalar_select 0, %s4, %s2
  $region1: #{tpu_custom_call.1} parent=0
    #allocation2 [shape = 'u8[65536]{0}', space=vmem, size = 0x10000, scoped, tag = 'input window, operand 0, single buffered']
    #allocation3 [shape = 's32[1]{0}', space=sflag, size = 0x4, scoped, tag = 'scoped memory for tpu_custom_call.1']
    #allocation4 [shape = 's32[1]{0}', space=sflag, size = 0x4, scoped, tag = 'scoped memory for tpu_custom_call.1']
    #allocation5 [shape = 'u8[65536]{0}', space=vmem, size = 0x10000, scoped, tag = 'output window, operand 0, single buffered']
    %6 = vsyncpa [#allocation3], 0
    %7 = vsyncpa [#allocation4], 0
    // Predicated region
    $region2: #{tpu_custom_call.1} parent=1 // pred_check
      _
    $region3: #{tpu_custom_call.1} parent=1 // pred_check_branch
      %9 = sbr.rel (0) target = $region5
    $region4: #{tpu_custom_call.1} parent=1 // pred_region
      %s11 = ssub.s32 2048, 2048
      %12 = vsyncadd [#allocation3], %s11
      %s13 = sshll.u32 [#allocation2], 4
      %s14 = int_to_ptr.vmem [resolvable:$true] %s13
      %19 = dma.hbm_to_vmem [thread:$0]  %s0, 2048, %s14, [#allocation3], 128, 128, 8
    $region5: #{tpu_custom_call.1} parent=1 // pred_fallthru
      _
    // Predicated region
    $region6: #{tpu_custom_call.1} parent=1 // pred_check
      _
    $region7: #{tpu_custom_call.1} parent=1 // pred_check_branch
      %21 = sbr.rel (0) target = $region9
    $region8: #{tpu_custom_call.1} parent=1 // pred_region
      %22 = dma.done [#allocation3], 2048
    $region9: #{tpu_custom_call.1} parent=1 // pred_fallthru
      _
    %p23 = scmp.eq.s32.totalorder 0, 0
    // Predicated region
    $region10: #{tpu_custom_call.1} parent=1 // pred_check
      %p24 = pneg %p23
    $region11: #{tpu_custom_call.1} parent=1 // pred_check_branch
      %26 = sbr.rel (%p24) target = $region13
    $region12: #{tpu_custom_call.1} parent=1 // pred_region
      %27 = vst [vmem:[#allocation5] sm:$0xff] 0.0
      %28 = vst [vmem:[#allocation5 + $0x8] sm:$0xff] 0.0
      %29 = vst [vmem:[#allocation5 + $0x10] sm:$0xff] 0.0
      %30 = vst [vmem:[#allocation5 + $0x18] sm:$0xff] 0.0
      %31 = vst [vmem:[#allocation5 + $0x20] sm:$0xff] 0.0
      %32 = vst [vmem:[#allocation5 + $0x28] sm:$0xff] 0.0
      %33 = vst [vmem:[#allocation5 + $0x30] sm:$0xff] 0.0
      %34 = vst [vmem:[#allocation5 + $0x38] sm:$0xff] 0.0
      %35 = vst [vmem:[#allocation5 + $0x40] sm:$0xff] 0.0
      %36 = vst [vmem:[#allocation5 + $0x48] sm:$0xff] 0.0
      %37 = vst [vmem:[#allocation5 + $0x50] sm:$0xff] 0.0
      %38 = vst [vmem:[#allocation5 + $0x58] sm:$0xff] 0.0
      %39 = vst [vmem:[#allocation5 + $0x60] sm:$0xff] 0.0
      %40 = vst [vmem:[#allocation5 + $0x68] sm:$0xff] 0.0
      %41 = vst [vmem:[#allocation5 + $0x70] sm:$0xff] 0.0
      %42 = vst [vmem:[#allocation5 + $0x78] sm:$0xff] 0.0
    $region13: #{tpu_custom_call.1} parent=1 // pred_fallthru
      _
    %v43 = vld [vmem:[#allocation2] sm:$0xff]
    %v44 = vld [vmem:[#allocation2 + $0x8] sm:$0xff]
    %v45 = vld [vmem:[#allocation2 + $0x10] sm:$0xff]
    %v46 = vld [vmem:[#allocation2 + $0x18] sm:$0xff]
    %v47 = vld [vmem:[#allocation2 + $0x20] sm:$0xff]
    %v48 = vld [vmem:[#allocation2 + $0x28] sm:$0xff]
    %v49 = vld [vmem:[#allocation2 + $0x30] sm:$0xff]
    %v50 = vld [vmem:[#allocation2 + $0x38] sm:$0xff]
    %v51 = vld [vmem:[#allocation2 + $0x40] sm:$0xff]
    %v52 = vld [vmem:[#allocation2 + $0x48] sm:$0xff]
    %v53 = vld [vmem:[#allocation2 + $0x50] sm:$0xff]
    %v54 = vld [vmem:[#allocation2 + $0x58] sm:$0xff]
    %v55 = vld [vmem:[#allocation2 + $0x60] sm:$0xff]
    %v56 = vld [vmem:[#allocation2 + $0x68] sm:$0xff]
    %v57 = vld [vmem:[#allocation2 + $0x70] sm:$0xff]
    %v58 = vld [vmem:[#allocation2 + $0x78] sm:$0xff]
    %v59 = vld [vmem:[#allocation5] sm:$0xff]
    %v60 = vld [vmem:[#allocation5 + $0x8] sm:$0xff]
    %v61 = vld [vmem:[#allocation5 + $0x10] sm:$0xff]
    %v62 = vld [vmem:[#allocation5 + $0x18] sm:$0xff]
    %v63 = vld [vmem:[#allocation5 + $0x20] sm:$0xff]
    %v64 = vld [vmem:[#allocation5 + $0x28] sm:$0xff]
    %v65 = vld [vmem:[#allocation5 + $0x30] sm:$0xff]
    %v66 = vld [vmem:[#allocation5 + $0x38] sm:$0xff]
    %v67 = vld [vmem:[#allocation5 + $0x40] sm:$0xff]
    %v68 = vld [vmem:[#allocation5 + $0x48] sm:$0xff]
    %v69 = vld [vmem:[#allocation5 + $0x50] sm:$0xff]
    %v70 = vld [vmem:[#allocation5 + $0x58] sm:$0xff]
    %v71 = vld [vmem:[#allocation5 + $0x60] sm:$0xff]
    %v72 = vld [vmem:[#allocation5 + $0x68] sm:$0xff]
    %v73 = vld [vmem:[#allocation5 + $0x70] sm:$0xff]
    %v74 = vld [vmem:[#allocation5 + $0x78] sm:$0xff]
    %75 = vmatprep.subr.mxu0 0.0
    %76 = vmatpush1.xpose.msra.mxu0 %v43
    %77 = vmatprep.subr.mxu0 0.0
    %78 = vmatpush1.xpose.msra.mxu0 %v44
    %79 = vmatprep.subr.mxu0 0.0
    %80 = vmatpush1.xpose.msra.mxu0 %v45
    %81 = vmatprep.subr.mxu0 0.0
    %82 = vmatpush1.xpose.msra.mxu0 %v46
    %83 = vmatprep.subr.mxu0 0.0
    %84 = vmatpush1.xpose.msra.mxu0 %v47
    %85 = vmatprep.subr.mxu0 0.0
    %86 = vmatpush1.xpose.msra.mxu0 %v48
    %87 = vmatprep.subr.mxu0 0.0
    %88 = vmatpush1.xpose.msra.mxu0 %v49
    %89 = vmatprep.subr.mxu0 0.0
    %90 = vmatpush1.xpose.msra.mxu0 %v50
    %91 = vmatprep.subr.mxu0 0.0
    %92 = vmatpush1.xpose.msra.mxu0 %v51
    %93 = vmatprep.subr.mxu0 0.0
    %94 = vmatpush1.xpose.msra.mxu0 %v52
    %95 = vmatprep.subr.mxu0 0.0
    %96 = vmatpush1.xpose.msra.mxu0 %v53
    %97 = vmatprep.subr.mxu0 0.0
    %98 = vmatpush1.xpose.msra.mxu0 %v54
    %99 = vmatprep.subr.mxu0 0.0
    %100 = vmatpush1.xpose.msra.mxu0 %v55
    %101 = vmatprep.subr.mxu0 0.0
    %102 = vmatpush1.xpose.msra.mxu0 %v56
    %103 = vmatprep.subr.mxu0 0.0
    %104 = vmatpush1.xpose.msra.mxu0 %v57
    %105 = vmatprep.subr.mxu0 0.0
    %106 = vmatpush1.xpose.msra.mxu0 %v58
    %107 = vmatprep.subr.mxu0 0.0
    %108 = vmatpush1.xpose.msra.mxu0 0.0
    %109 = vmatprep.subr.mxu0 0.0
    %110 = vmatpush1.xpose.msra.mxu0 0.0
    %111 = vmatprep.subr.mxu0 0.0
    %112 = vmatpush1.xpose.msra.mxu0 0.0
    %113 = vmatprep.subr.mxu0 0.0
    %114 = vmatpush1.xpose.msra.mxu0 0.0
    %115 = vmatprep.subr.mxu0 0.0
    %116 = vmatpush1.xpose.msra.mxu0 0.0
    %117 = vmatprep.subr.mxu0 0.0
    %118 = vmatpush1.xpose.msra.mxu0 0.0
    %119 = vmatprep.subr.mxu0 0.0
    %120 = vmatpush1.xpose.msra.mxu0 0.0
    %121 = vmatprep.subr.mxu0 0.0
    %122 = vmatpush1.xpose.msra.mxu0 0.0
    %123 = vmatprep.subr.mxu0 0.0
    %124 = vmatpush1.xpose.msra.mxu0 0.0
    %125 = vmatprep.subr.mxu0 0.0
    %126 = vmatpush1.xpose.msra.mxu0 0.0
    %127 = vmatprep.subr.mxu0 0.0
    %128 = vmatpush1.xpose.msra.mxu0 0.0
    %129 = vmatprep.subr.mxu0 0.0
    %130 = vmatpush1.xpose.msra.mxu0 0.0
    %131 = vmatprep.subr.mxu0 0.0
    %132 = vmatpush1.xpose.msra.mxu0 0.0
    %133 = vmatprep.subr.mxu0 0.0
    %134 = vmatpush1.xpose.msra.mxu0 0.0
    %135 = vmatprep.subr.mxu0 0.0
    %136 = vmatpush1.xpose.msra.mxu0 0.0
    %137 = vmatprep.subr.mxu0 0.0
    %138 = vmatpush1.xpose.msra.mxu0 0.0
    %139 = vmatprep.mubr.f32.mxu0 0.0
    %140 = vmatmul.mubr.f32.gmra.mrb[0].mxu0 %v43
    %v141 = vpop.f32.mrb[0].mxu0
    %v142 = vadd.f32 0.0, %v141
    %v143 = vpop.f32.mrb[0].mxu0
    %144 = vmatprep.mubr.f32.mxu0 0.0
    %145 = vmatmul.mubr.f32.gmra.mrb[0].mxu0 %v44
    %v146 = vpop.f32.mrb[0].mxu0
    %v147 = vadd.f32 0.0, %v146
    %v148 = vpop.f32.mrb[0].mxu0
    %149 = vmatprep.mubr.f32.mxu0 0.0
    %150 = vmatmul.mubr.f32.gmra.mrb[0].mxu0 %v45
    %v151 = vpop.f32.mrb[0].mxu0
    %v152 = vadd.f32 0.0, %v151
    %v153 = vpop.f32.mrb[0].mxu0
    %154 = vmatprep.mubr.f32.mxu0 0.0
    %155 = vmatmul.mubr.f32.gmra.mrb[0].mxu0 %v46
    %v156 = vpop.f32.mrb[0].mxu0
    %v157 = vadd.f32 0.0, %v156
    %v158 = vpop.f32.mrb[0].mxu0
    %159 = vmatprep.mubr.f32.mxu0 0.0
    %160 = vmatmul.mubr.f32.gmra.mrb[0].mxu0 %v47
    %v161 = vpop.f32.mrb[0].mxu0
    %v162 = vadd.f32 0.0, %v161
    %v163 = vpop.f32.mrb[0].mxu0
    %164 = vmatprep.mubr.f32.mxu0 0.0
    %165 = vmatmul.mubr.f32.gmra.mrb[0].mxu0 %v48
    %v166 = vpop.f32.mrb[0].mxu0
    %v167 = vadd.f32 0.0, %v166
    %v168 = vpop.f32.mrb[0].mxu0
    %169 = vmatprep.mubr.f32.mxu0 0.0
    %170 = vmatmul.mubr.f32.gmra.mrb[0].mxu0 %v49
    %v171 = vpop.f32.mrb[0].mxu0
    %v172 = vadd.f32 0.0, %v171
    %v173 = vpop.f32.mrb[0].mxu0
    %174 = vmatprep.mubr.f32.mxu0 0.0
    %175 = vmatmul.mubr.f32.gmra.mrb[0].mxu0 %v50
    %v176 = vpop.f32.mrb[0].mxu0
    %v177 = vadd.f32 0.0, %v176
    %v178 = vpop.f32.mrb[0].mxu0
    %179 = vmatprep.mubr.f32.mxu0 0.0
    %180 = vmatmul.mubr.f32.gmra.mrb[0].mxu0 %v51
    %v181 = vpop.f32.mrb[0].mxu0
    %v182 = vadd.f32 0.0, %v181
    %v183 = vpop.f32.mrb[0].mxu0
    %184 = vmatprep.mubr.f32.mxu0 0.0
    %185 = vmatmul.mubr.f32.gmra.mrb[0].mxu0 %v52
    %v186 = vpop.f32.mrb[0].mxu0
    %v187 = vadd.f32 0.0, %v186
    %v188 = vpop.f32.mrb[0].mxu0
    %189 = vmatprep.mubr.f32.mxu0 0.0
    %190 = vmatmul.mubr.f32.gmra.mrb[0].mxu0 %v53
    %v191 = vpop.f32.mrb[0].mxu0
    %v192 = vadd.f32 0.0, %v191
    %v193 = vpop.f32.mrb[0].mxu0
    %194 = vmatprep.mubr.f32.mxu0 0.0
    %195 = vmatmul.mubr.f32.gmra.mrb[0].mxu0 %v54
    %v196 = vpop.f32.mrb[0].mxu0
    %v197 = vadd.f32 0.0, %v196
    %v198 = vpop.f32.mrb[0].mxu0
    %199 = vmatprep.mubr.f32.mxu0 0.0
    %200 = vmatmul.mubr.f32.gmra.mrb[0].mxu0 %v55
    %v201 = vpop.f32.mrb[0].mxu0
    %v202 = vadd.f32 0.0, %v201
    %v203 = vpop.f32.mrb[0].mxu0
    %204 = vmatprep.mubr.f32.mxu0 0.0
    %205 = vmatmul.mubr.f32.gmra.mrb[0].mxu0 %v56
    %v206 = vpop.f32.mrb[0].mxu0
    %v207 = vadd.f32 0.0, %v206
    %v208 = vpop.f32.mrb[0].mxu0
    %209 = vmatprep.mubr.f32.mxu0 0.0
    %210 = vmatmul.mubr.f32.gmra.mrb[0].mxu0 %v57
    %v211 = vpop.f32.mrb[0].mxu0
    %v212 = vadd.f32 0.0, %v211
    %v213 = vpop.f32.mrb[0].mxu0
    %214 = vmatprep.mubr.f32.mxu0 0.0
    %215 = vmatmul.mubr.f32.gmra.mrb[0].mxu0 %v58
    %v216 = vpop.f32.mrb[0].mxu0
    %v217 = vadd.f32 0.0, %v216
    %v218 = vpop.f32.mrb[0].mxu0
    %219 = vdwg.mxu0
    %v220 = vadd.f32 %v59, %v142
    %v221 = vadd.f32 %v60, %v147
    %v222 = vadd.f32 %v61, %v152
    %v223 = vadd.f32 %v62, %v157
    %v224 = vadd.f32 %v63, %v162
    %v225 = vadd.f32 %v64, %v167
    %v226 = vadd.f32 %v65, %v172
    %v227 = vadd.f32 %v66, %v177
    %v228 = vadd.f32 %v67, %v182
    %v229 = vadd.f32 %v68, %v187
    %v230 = vadd.f32 %v69, %v192
    %v231 = vadd.f32 %v70, %v197
    %v232 = vadd.f32 %v71, %v202
    %v233 = vadd.f32 %v72, %v207
    %v234 = vadd.f32 %v73, %v212
    %v235 = vadd.f32 %v74, %v217
    %236 = vst [vmem:[#allocation5] sm:$0xff] %v220
    %237 = vst [vmem:[#allocation5 + $0x8] sm:$0xff] %v221
    %238 = vst [vmem:[#allocation5 + $0x10] sm:$0xff] %v222
    %239 = vst [vmem:[#allocation5 + $0x18] sm:$0xff] %v223
    %240 = vst [vmem:[#allocation5 + $0x20] sm:$0xff] %v224
    %241 = vst [vmem:[#allocation5 + $0x28] sm:$0xff] %v225
    %242 = vst [vmem:[#allocation5 + $0x30] sm:$0xff] %v226
    %243 = vst [vmem:[#allocation5 + $0x38] sm:$0xff] %v227
    %244 = vst [vmem:[#allocation5 + $0x40] sm:$0xff] %v228
    %245 = vst [vmem:[#allocation5 + $0x48] sm:$0xff] %v229
    %246 = vst [vmem:[#allocation5 + $0x50] sm:$0xff] %v230
    %247 = vst [vmem:[#allocation5 + $0x58] sm:$0xff] %v231
    %248 = vst [vmem:[#allocation5 + $0x60] sm:$0xff] %v232
    %249 = vst [vmem:[#allocation5 + $0x68] sm:$0xff] %v233
    %250 = vst [vmem:[#allocation5 + $0x70] sm:$0xff] %v234
    %251 = vst [vmem:[#allocation5 + $0x78] sm:$0xff] %v235
    // Predicated region
    $region14: #{tpu_custom_call.1} parent=1 // pred_check
      %p252 = pneg %p23
    $region15: #{tpu_custom_call.1} parent=1 // pred_check_branch
      %254 = sbr.rel (%p252) target = $region17
    $region16: #{tpu_custom_call.1} parent=1 // pred_region
      %v255 = vld [vmem:[#allocation5] sm:$0xff]
      %v256 = vld [vmem:[#allocation5 + $0x8] sm:$0xff]
      %v257 = vld [vmem:[#allocation5 + $0x10] sm:$0xff]
      %v258 = vld [vmem:[#allocation5 + $0x18] sm:$0xff]
      %v259 = vld [vmem:[#allocation5 + $0x20] sm:$0xff]
      %v260 = vld [vmem:[#allocation5 + $0x28] sm:$0xff]
      %v261 = vld [vmem:[#allocation5 + $0x30] sm:$0xff]
      %v262 = vld [vmem:[#allocation5 + $0x38] sm:$0xff]
      %v263 = vld [vmem:[#allocation5 + $0x40] sm:$0xff]
      %v264 = vld [vmem:[#allocation5 + $0x48] sm:$0xff]
      %v265 = vld [vmem:[#allocation5 + $0x50] sm:$0xff]
      %v266 = vld [vmem:[#allocation5 + $0x58] sm:$0xff]
      %v267 = vld [vmem:[#allocation5 + $0x60] sm:$0xff]
      %v268 = vld [vmem:[#allocation5 + $0x68] sm:$0xff]
      %v269 = vld [vmem:[#allocation5 + $0x70] sm:$0xff]
      %v270 = vld [vmem:[#allocation5 + $0x78] sm:$0xff]
      %v271 = vmul.f32 %v255, 0.00048828125
      %v272 = vmul.f32 %v256, 0.00048828125
      %v273 = vmul.f32 %v257, 0.00048828125
      %v274 = vmul.f32 %v258, 0.00048828125
      %v275 = vmul.f32 %v259, 0.00048828125
      %v276 = vmul.f32 %v260, 0.00048828125
      %v277 = vmul.f32 %v261, 0.00048828125
      %v278 = vmul.f32 %v262, 0.00048828125
      %v279 = vmul.f32 %v263, 0.00048828125
      %v280 = vmul.f32 %v264, 0.00048828125
      %v281 = vmul.f32 %v265, 0.00048828125
      %v282 = vmul.f32 %v266, 0.00048828125
      %v283 = vmul.f32 %v267, 0.00048828125
      %v284 = vmul.f32 %v268, 0.00048828125
      %v285 = vmul.f32 %v269, 0.00048828125
      %v286 = vmul.f32 %v270, 0.00048828125
      %287 = vst [vmem:[#allocation5] sm:$0xff] %v271
      %288 = vst [vmem:[#allocation5 + $0x8] sm:$0xff] %v272
      %289 = vst [vmem:[#allocation5 + $0x10] sm:$0xff] %v273
      %290 = vst [vmem:[#allocation5 + $0x18] sm:$0xff] %v274
      %291 = vst [vmem:[#allocation5 + $0x20] sm:$0xff] %v275
      %292 = vst [vmem:[#allocation5 + $0x28] sm:$0xff] %v276
      %293 = vst [vmem:[#allocation5 + $0x30] sm:$0xff] %v277
      %294 = vst [vmem:[#allocation5 + $0x38] sm:$0xff] %v278
      %295 = vst [vmem:[#allocation5 + $0x40] sm:$0xff] %v279
      %296 = vst [vmem:[#allocation5 + $0x48] sm:$0xff] %v280
      %297 = vst [vmem:[#allocation5 + $0x50] sm:$0xff] %v281
      %298 = vst [vmem:[#allocation5 + $0x58] sm:$0xff] %v282
      %299 = vst [vmem:[#allocation5 + $0x60] sm:$0xff] %v283
      %300 = vst [vmem:[#allocation5 + $0x68] sm:$0xff] %v284
      %301 = vst [vmem:[#allocation5 + $0x70] sm:$0xff] %v285
      %302 = vst [vmem:[#allocation5 + $0x78] sm:$0xff] %v286
    $region17: #{tpu_custom_call.1} parent=1 // pred_fallthru
      _
    // Predicated region
    $region18: #{tpu_custom_call.1} parent=1 // pred_check
      _
    $region19: #{tpu_custom_call.1} parent=1 // pred_check_branch
      %304 = sbr.rel (0) target = $region21
    $region20: #{tpu_custom_call.1} parent=1 // pred_region
      %s306 = ssub.s32 2048, 2048
      %307 = vsyncadd [#allocation4], %s306
      %s308 = sshll.u32 [#allocation5], 4
      %s309 = int_to_ptr.vmem [resolvable:$true] %s308
      %314 = dma.vmem_to_hbm [thread:$0]  %s309, 2048, %s1, [#allocation4], 128, 128, 8
    $region21: #{tpu_custom_call.1} parent=1 // pred_fallthru
      _
    // Predicated region
    $region22: #{tpu_custom_call.1} parent=1 // pred_check
      _
    $region23: #{tpu_custom_call.1} parent=1 // pred_check_branch
      %316 = sbr.rel (0) target = $region25
    $region24: #{tpu_custom_call.1} parent=1 // pred_region
      %317 = dma.done [#allocation4], 2048
    $region25: #{tpu_custom_call.1} parent=1 // pred_fallthru
      _
    %318 = vsyncpa [#allocation3], 1
    %319 = vsyncpa [#allocation4], 1

</llo_original>
